<compile_context>
chip_gen: v5e
topology: v5e:2x2
jax: 0.10.0
libtpu: 0.0.40
codegen_flags: <defaults>
</compile_context>

<pallas_src>
import jax
import jax.numpy as jnp
from jax import lax
from jax.experimental import pallas as pl
from jax.experimental.pallas import tpu as pltpu


def _round_up(x, m):
    return (x + m - 1) // m * m


def _linear_nobias_kernel(x_ref, wt_ref, o_ref):
    # x_ref: [TM, d_inp], wt_ref: [d_inp, d_model] (pre-transposed, lane-dense),
    # o_ref: [TM, d_model].  Plain [TM,K] x [K,N] matmul, f32 accumulation.
    o_ref[...] = jnp.dot(
        x_ref[...], wt_ref[...], preferred_element_type=jnp.float32
    ).astype(o_ref.dtype)


def prepare_time_feature_weight(weight):
    """One-time (module-init) prep: PyTorch [d_model, d_inp] -> [d_inp, d_model]."""
    return jnp.asarray(weight).T


def _choose_tm(M, d_inp, d_model, tm_req, out_bytes):
    """Pick the row-tile size.

    Largest tile that (a) keeps the double-buffered x/out tiles under a VMEM
    budget safe on every generation (v7x has only 64 MiB physical VMEM) and
    (b) leaves at least 2 grid steps so v7x's two TensorCores both get work.
    """
    bytes_per_row = 4 * d_inp + out_bytes * d_model  # one row of x + one row of out
    vmem_budget = 40 * 1024 * 1024                   # headroom vs 64 MiB on v7x
    tm_vmem = max(8, (vmem_budget // (2 * bytes_per_row)) // 8 * 8)
    tm = min(tm_req, tm_vmem)
    # Ensure grid_m >= 2 (dual-core sharding on v7x; harmless elsewhere).
    tm = min(tm, max(8, _round_up(pl.cdiv(M, 2), 8)))
    if tm >= M:
        tm = M  # full-extent block (legal regardless of divisibility)
    return tm, bytes_per_row


def _time_feature_embedding_pallas(x2d, weight_t, *, tm=4096, out_dtype=None):
    """x2d: [M, d_inp], weight_t: [d_inp, d_model] -> [M, d_model]."""
    M, d_inp = x2d.shape
    d_model = weight_t.shape[1]
    out_dtype = x2d.dtype if out_dtype is None else out_dtype
    out_bytes = jnp.dtype(out_dtype).itemsize

    tm, bytes_per_row = _choose_tm(M, d_inp, d_model, tm, out_bytes)
    grid_m = pl.cdiv(M, tm)

    # Real footprint: double-buffered x + out tiles, plus the (tiny) resident
    # weight (default double-buffered too), plus slack for edge blocks.
    w_bytes = d_inp * d_model * weight_t.dtype.itemsize
    vmem_limit = int(
        min(64 * 1024 * 1024,
            max(16 * 1024 * 1024, 2 * tm * bytes_per_row + 2 * w_bytes + (4 << 20)))
    )

    cost = pl.CostEstimate(
        flops=2 * M * d_model * d_inp,
        transcendentals=0,
        bytes_accessed=4 * M * d_inp + out_bytes * M * d_model + w_bytes,
    )

    return pl.pallas_call(
        _linear_nobias_kernel,
        out_shape=jax.ShapeDtypeStruct((M, d_model), out_dtype),
        grid_spec=pltpu.PrefetchScalarGridSpec(
            num_scalar_prefetch=0,
            grid=(grid_m,),
            in_specs=[
                pl.BlockSpec((tm, d_inp), lambda i: (i, 0)),
                # Constant block index: weight stays resident in VMEM across
                # all grid steps (default Buffered(2); second buffer is only a
                # few KiB, not worth overriding).
                pl.BlockSpec((d_inp, d_model), lambda i: (0, 0)),
            ],
            out_specs=pl.BlockSpec((tm, d_model), lambda i: (i, 0)),
        ),
        compiler_params=pltpu.CompilerParams(
            dimension_semantics=("parallel",),  # dual-core sharding on v7x
            vmem_limit_bytes=vmem_limit,
        ),
        cost_estimate=cost,
    )(x2d, weight_t)


def time_feature_embedding(x, weight=None, *, weight_t=None, use_pallas=None,
                           tm=4096, out_dtype=None):
    """TimeFeatureEmbedding forward: y = x @ W.T (no bias).

    x: [B, L, d_inp]; weight: PyTorch nn.Linear layout [d_model, d_inp].
    weight_t: optional pre-transposed/cached [d_inp, d_model] (preferred; skips
    the per-call transpose).  use_pallas: None = auto (XLA fallback for tiny
    workloads), True/False to force.
    """
    if weight_t is None:
        weight_t = prepare_time_feature_weight(weight)
    B, L, d_inp = x.shape
    d_model = weight_t.shape[1]
    M = B * L

    if use_pallas is None:
        # A standalone Pallas call is pure overhead at tiny sizes.
        use_pallas = (M * d_model) >= (1 << 20)

    if not use_pallas:
        y2d = jnp.dot(
            x.reshape(M, d_inp), weight_t, preferred_element_type=jnp.float32
        ).astype(x.dtype if out_dtype is None else out_dtype)
        return y2d.reshape(B, L, d_model)

    y2d = _time_feature_embedding_pallas(
        x.reshape(M, d_inp), weight_t, tm=tm, out_dtype=out_dtype
    )
    return y2d.reshape(B, L, d_model)


if __name__ == "__main__":
    key = jax.random.PRNGKey(0)
    kx, kw, kx2, kw2 = jax.random.split(key, 4)

    # --- Test 1: module-like small shapes (freq='h' -> d_inp=4), d_model=32.
    # d_model < 128 -> exercises the unpadded full-extent-last-dim output path.
    B, L, d_inp, d_model = 2, 8, 4, 32
    x = jax.random.normal(kx, (B, L, d_inp), dtype=jnp.float32)
    weight = jax.random.normal(kw, (d_model, d_inp), dtype=jnp.float32) * (
        1.0 / jnp.sqrt(d_inp)
    )
    weight_t = prepare_time_feature_weight(weight)  # one-time module-init prep

    y = time_feature_embedding(x, weight_t=weight_t, use_pallas=True)  # force Pallas
    jax.block_until_ready(y)
    y_ref = jnp.einsum("bld,md->blm", x, weight)
    assert y.shape == (B, L, d_model)
    assert jnp.allclose(y, y_ref, atol=1e-5, rtol=1e-5)

    # Auto path (tiny workload -> fused XLA fallback) must match too.
    y_auto = time_feature_embedding(x, weight)
    jax.block_until_ready(y_auto)
    assert jnp.allclose(y_auto, y_ref, atol=1e-5, rtol=1e-5)

    # --- Test 2: modestly larger shapes exercising the tiled grid
    # (M = 2048 rows -> grid_m = 2) with a lane-aligned d_model.
    B2, L2, d_model2 = 4, 512, 128
    x2 = jax.random.normal(kx2, (B2, L2, d_inp), dtype=jnp.float32)
    w2 = jax.random.normal(kw2, (d_model2, d_inp), dtype=jnp.float32) * (
        1.0 / jnp.sqrt(d_inp)
    )
    w2_t = prepare_time_feature_weight(w2)
    y2 = time_feature_embedding(x2, weight_t=w2_t, use_pallas=True)
    jax.block_until_ready(y2)
    y2_ref = jnp.einsum("bld,md->blm", x2, w2)
    assert y2.shape == (B2, L2, d_model2)
    assert jnp.allclose(y2, y2_ref, atol=1e-4, rtol=1e-4)

    print("KERNEL_OK")
</pallas_src>

<mosaic_0001>
module attributes {stable_mosaic.version = 11 : i64} {
  func.func @_linear_nobias_kernel(%arg0: i32, %arg1: memref<8x4xf32, #tpu.memory_space<vmem>>, %arg2: memref<4x32xf32, #tpu.memory_space<vmem>>, %arg3: memref<8x32xf32, #tpu.memory_space<vmem>>) attributes {dimension_semantics = [#tpu.dimension_semantics<parallel>], iteration_bounds = array<i64: 2>, scalar_prefetch = 0 : i64, scratch_operands = 0 : i64, tpu.core_type = #tpu.core_type<tc>, window_params = [{transform_indices = @transform_0, window_bounds = array<i64: 8, 4>}, {pipeline_mode = #tpu.pipeline_mode<synchronous>, transform_indices = @transform_1, window_bounds = array<i64: 4, 32>}, {transform_indices = @transform_2, window_bounds = array<i64: 8, 32>}]} {
    %c0 = arith.constant 0 : index
    %c0_0 = arith.constant 0 : index
    %0 = vector.load %arg1[%c0, %c0_0] : memref<8x4xf32, #tpu.memory_space<vmem>>, vector<8x4xf32>
    %c0_1 = arith.constant 0 : index
    %c0_2 = arith.constant 0 : index
    %1 = vector.load %arg2[%c0_1, %c0_2] : memref<4x32xf32, #tpu.memory_space<vmem>>, vector<4x32xf32>
    %cst = arith.constant dense<0.000000e+00> : vector<8x32xf32>
    %2 = tpu.matmul %0, %1, %cst {dimension_numbers = #tpu.dot_dimension_numbers<[1], [0], [0], [1], [0, 0, 1, 1], [], []>} : vector<8x4xf32>, vector<4x32xf32>, vector<8x32xf32> -> vector<8x32xf32>
    %c0_3 = arith.constant 0 : index
    %c0_4 = arith.constant 0 : index
    %3 = vector.load %arg3[%c0_3, %c0_4] : memref<8x32xf32, #tpu.memory_space<vmem>>, vector<8x32xf32>
    tpu.vector_store %arg3[%c0_3, %c0_4], %2 {strides = array<i32>} : memref<8x32xf32, #tpu.memory_space<vmem>>, vector<8x32xf32>,
    return
  }
  func.func @transform_0(%arg0: i32) -> (i32, i32) {
    %c0_i32 = arith.constant 0 : i32
    %c0_i32_0 = arith.constant 0 : i32
    return %arg0, %c0_i32 : i32, i32
  }
  func.func @transform_1(%arg0: i32) -> (i32, i32) {
    %c0_i32 = arith.constant 0 : i32
    %c0_i32_0 = arith.constant 0 : i32
    %c0_i32_1 = arith.constant 0 : i32
    return %c0_i32, %c0_i32_0 : i32, i32
  }
  func.func @transform_2(%arg0: i32) -> (i32, i32) {
    %c0_i32 = arith.constant 0 : i32
    %c0_i32_0 = arith.constant 0 : i32
    return %arg0, %c0_i32 : i32, i32
  }
}

</mosaic_0001>

<llo_original>
// kernel: tpu_custom_call.1
$region0: #{tpu_custom_call.1}
  #allocation0 [shape = 'u32[]', space=smem, size = 0x4, offset = 0x4, fixed_abs, tag = 'smem constant byte address 0x4 - core index']
  #allocation1 [shape = 'u32[72,128]{1,0:T(1,128)}', space=vmem, size = 0x9000, scoped, tag = 'internal scratch']
  %s0 = inlined_call_operand.vmem [shape: f32[16,4], index: 0, kind: input, shape index: {}]
  %s1 = inlined_call_operand.vmem [shape: f32[4,32], index: 1, kind: input, shape index: {}]
  %s2 = inlined_call_operand.hbm [shape: f32[16,32], index: 2, kind: output, shape index: {}]
  %s3 = sld [smem:[#allocation0]]
  $region41: #{tpu_custom_call.1} parent=0
    _
  %s5 = ssub.s32 1, %s3
  %s6 = scalar_select 0, %s5, %s3
  $region1: #{tpu_custom_call.1} parent=0
    #allocation2 [shape = 'u8[8192]{0}', space=vmem, size = 0x2000, scoped, tag = 'output window, operand 0']
    #allocation3 [shape = 's32[2]{0}', space=sflag, size = 0x8, scoped, tag = 'scoped memory for tpu_custom_call.1']
    %7 = vsyncpa [#allocation3], 0
    %s8 = scalar_lea.sflag [#allocation3], 1
    %9 = vsyncpa %s8, 0
    loop: start=0, step=1, limit=4
    $region2: #{tpu_custom_call.1} parent=1 // loop_pre_header
      _
    $region3: #{tpu_custom_call.1} parent=1 // loop_header
      %s11 = sphi 0, %s15
      %p12 = scmp.ge.s32.totalorder %s11, 4
      %s21 = sphi 0, %s23
      %s24 = sphi 0, %s21
      %s25 = sphi 0, %s24
      %s41 = sphi 0, %s25
      %s45 = sphi 0, %s45
      %s47 = sphi 0, %s45
      %s48 = sphi 0, %s47
      %s62 = sphi 0, %s48
      %s68 = sphi 0, %s70
      %s71 = sphi 0, %s68
      %s72 = sphi 0, %s71
      %s88 = sphi 0, %s72
    $region4: #{tpu_custom_call.1} parent=1 // loop_header_branch
      %14 = sbr.rel (%p12) target = $region8
    $region5: #{tpu_custom_call.1} parent=1 // loop_body
      %s16 = ssub.s32 %s11, 1
      %s17 = ssub.s32 %s11, 2
      %s18 = sadd.s32 %s11, 1
      %s19 = ssub.s32 %s11, %s18
      %p20 = scmp.eq.s32.totalorder %s19, 0
      %s22 = sadd.s32 %s21, 1
      %s23 = scalar_select %p20, %s21, %s22
      %p26 = pneg %p20
      %p27 = scmp.eq.s32.totalorder %s11, 1
      %p28 = por %p26, %p27
      %p29 = scmp.ne.s32.totalorder %s21, %s24
      %p30 = scmp.eq.s32.totalorder %s11, 0
      %p31 = por %p29, %p30
      %p32 = scmp.ne.s32.totalorder %s21, %s24
      %p33 = scmp.eq.s32.totalorder %s16, 1
      %p34 = por %p32, %p33
      %p35 = scmp.ne.s32.totalorder %s24, %s25
      %p36 = scmp.eq.s32.totalorder %s16, 0
      %p37 = por %p35, %p36
      %p38 = scmp.ne.s32.totalorder %s24, %s25
      %p39 = scmp.eq.s32.totalorder %s17, 1
      %p40 = por %p38, %p39
      %p42 = scmp.ne.s32.totalorder %s25, %s41
      %p43 = scmp.eq.s32.totalorder %s17, 0
      %p44 = por %p42, %p43
      %s46 = sadd.s32 %s45, 1
      %p49 = scmp.eq.s32.totalorder %s11, 1
      %p50 = scmp.ne.s32.totalorder %s45, %s47
      %p51 = scmp.eq.s32.totalorder %s11, 0
      %p52 = por %p50, %p51
      %p53 = scmp.ne.s32.totalorder %s45, %s47
      %p54 = scmp.eq.s32.totalorder %s16, 1
      %p55 = por %p53, %p54
      %p56 = scmp.ne.s32.totalorder %s47, %s48
      %p57 = scmp.eq.s32.totalorder %s16, 0
      %p58 = por %p56, %p57
      %p59 = scmp.ne.s32.totalorder %s47, %s48
      %p60 = scmp.eq.s32.totalorder %s17, 1
      %p61 = por %p59, %p60
      %p63 = scmp.ne.s32.totalorder %s48, %s62
      %p64 = scmp.eq.s32.totalorder %s17, 0
      %p65 = por %p63, %p64
      %s66 = ssub.s32 %s11, %s18
      %p67 = scmp.eq.s32.totalorder %s66, 0
      %s69 = sadd.s32 %s68, 1
      %s70 = scalar_select %p67, %s68, %s69
      %p73 = pneg %p67
      %p74 = scmp.eq.s32.totalorder %s11, 1
      %p75 = por %p73, %p74
      %p76 = scmp.ne.s32.totalorder %s68, %s71
      %p77 = scmp.eq.s32.totalorder %s11, 0
      %p78 = por %p76, %p77
      %p79 = scmp.ne.s32.totalorder %s68, %s71
      %p80 = scmp.eq.s32.totalorder %s16, 1
      %p81 = por %p79, %p80
      %p82 = scmp.ne.s32.totalorder %s71, %s72
      %p83 = scmp.eq.s32.totalorder %s16, 0
      %p84 = por %p82, %p83
      %p85 = scmp.ne.s32.totalorder %s71, %s72
      %p86 = scmp.eq.s32.totalorder %s17, 1
      %p87 = por %p85, %p86
      %p89 = scmp.ne.s32.totalorder %s72, %s88
      %p90 = scmp.eq.s32.totalorder %s17, 0
      %p91 = por %p89, %p90
      %p92 = scmp.le.s32.totalorder 1, %s11
      %p93 = scmp.lt.s32.totalorder %s11, 3
      %p94 = pnand %p92, %p93
      %p95 = pneg %p94
      // Predicated region
      $region9: #{tpu_custom_call.1} parent=5 // pred_check
        _
      $region10: #{tpu_custom_call.1} parent=5 // pred_check_branch
        %97 = sbr.rel (%p94) target = $region12
      $region11: #{tpu_custom_call.1} parent=5 // pred_region
        %s98 = ssub.s32 %s11, 1
        // Predicated region
        $region13: #{tpu_custom_call.1} parent=11 // pred_check
          %p99 = pneg %p58
        $region14: #{tpu_custom_call.1} parent=11 // pred_check_branch
          %101 = sbr.rel (%p99) target = $region16
        $region15: #{tpu_custom_call.1} parent=11 // pred_region
          _
        $region16: #{tpu_custom_call.1} parent=11 // pred_fallthru
          _
      $region12: #{tpu_custom_call.1} parent=5 // pred_fallthru
        _
      %p102 = scmp.lt.s32.totalorder %s11, 2
      // Predicated region
      $region17: #{tpu_custom_call.1} parent=5 // pred_check
        %p103 = pneg %p102
      $region18: #{tpu_custom_call.1} parent=5 // pred_check_branch
        %105 = sbr.rel (%p103) target = $region20
      $region19: #{tpu_custom_call.1} parent=5 // pred_region
        // Predicated region
        $region21: #{tpu_custom_call.1} parent=19 // pred_check
          %p106 = pneg %p31
        $region22: #{tpu_custom_call.1} parent=19 // pred_check_branch
          %108 = sbr.rel (%p106) target = $region24
        $region23: #{tpu_custom_call.1} parent=19 // pred_region
          %p109 = scmp.lt.s32.totalorder %s11, 1
          %s110 = scalar_select %p109, %s11, 1
          %s111 = smul.addr %s110, 8
          %s112 = scalar_lea.vmem %s0, %s111
        $region24: #{tpu_custom_call.1} parent=19 // pred_fallthru
          _
      $region20: #{tpu_custom_call.1} parent=5 // pred_fallthru
        _
      %p113 = scmp.le.s32.totalorder 1, %s11
      %p114 = scmp.lt.s32.totalorder %s11, 3
      %p115 = pnand %p113, %p114
      %p116 = pneg %p115
      // Predicated region
      $region25: #{tpu_custom_call.1} parent=5 // pred_check
        _
      $region26: #{tpu_custom_call.1} parent=5 // pred_check_branch
        %118 = sbr.rel (%p115) target = $region28
      $region27: #{tpu_custom_call.1} parent=5 // pred_region
        %s119 = ssub.s32 %s11, 1
        %p120 = scmp.lt.s32.totalorder %s16, 1
        %s121 = scalar_select %p120, %s16, 1
        %s122 = smul.addr %s121, 8
        %s123 = scalar_lea.vmem %s0, %s122
        %p124 = pneg %p37
        %p125 = pneg %p34
        %p126 = pneg %p58
        %p127 = pneg %p55
        %p128 = pneg %p84
        %p129 = pneg %p81
        %s130 = sand.u32 %s71, 1
        %s131 = scalar_lea.sflag [#allocation3], %s130
        %s132 = sand.u32 %s71, 1
        %s133 = smul.addr %s132, 8
        %s134 = scalar_lea.vmem [#allocation2], %s133
        %p135 = scmp.lt.s32.totalorder %s16, 1
        %s136 = scalar_select %p135, %s16, 1
        %s137 = smul.addr %s136, 8
        %s138 = scalar_lea.vmem %s0, %s137
        %v139 = vld [vmem:[%s138] sm:$0xff]
        %v140 = vld [vmem:[%s1] sm:$0xf]
        %vm141 = vcmask 31744
        %v143 = vsel %vm141, %v139, 0
        %vm145 = vcmask 1043456
        %v147 = vsel %vm145, %v140, 0
        %149 = vmatpush.msra.mxu0 0.0
        %150 = vmatpush.msra.mxu0 0.0
        %151 = vmatpush.msra.mxu0 0.0
        %152 = vmatpush.msra.mxu0 0.0
        %153 = vmatpush.msra.mxu0 0.0
        %154 = vmatpush.msra.mxu0 0.0
        %155 = vmatpush.msra.mxu0 0.0
        %156 = vmatpush.msra.mxu0 0.0
        %157 = vmatpush.msra.mxu0 0.0
        %158 = vmatpush.msra.mxu0 0.0
        %159 = vmatpush.msra.mxu0 0.0
        %160 = vmatpush.msra.mxu0 0.0
        %161 = vmatpush.msra.mxu0 0.0
        %162 = vmatpush.msra.mxu0 0.0
        %163 = vmatpush.msra.mxu0 0.0
        %164 = vmatpush.msra.mxu0 %v147
        %165 = vmatmul.f32.gmra.mxu0 %v143
        %v166 = vpop.f32.mrf.mxu0
        %v167 = vadd.f32 0.0, %v166
        %168 = vdwg.mxu0
        %vm169 = vcmask 261120
        %170 = vst.msk [vmem:[%s134] sm:$0xff] %vm169, %v167
        %s171 = sand.u32 %s71, 1
        %s172 = scalar_lea.sflag [#allocation3], %s171
        %s173 = sand.u32 %s71, 1
        %s174 = smul.addr %s173, 8
        %s175 = scalar_lea.vmem [#allocation2], %s174
        // Predicated region
        $region29: #{tpu_custom_call.1} parent=27 // pred_check
          %p176 = pneg %p81
        $region30: #{tpu_custom_call.1} parent=27 // pred_check_branch
          %178 = sbr.rel (%p176) target = $region32
        $region31: #{tpu_custom_call.1} parent=27 // pred_region
          %180 = vsyncadd %s172, 0
          %s181 = smul.addr %s16, 8
          %s182 = scalar_lea.hbm %s2, %s181
          %s184 = sshll.u32 %s175, 4
          %s185 = int_to_ptr.vmem [resolvable:$true] %s184
          %s186 = sshll.u32 %s182, 4
          %s187 = int_to_ptr.hbm [resolvable:$true] %s186
          %189 = dma.vmem_to_hbm [thread:$0]  %s185, 128, %s187, %s172
        $region32: #{tpu_custom_call.1} parent=27 // pred_fallthru
          _
      $region28: #{tpu_custom_call.1} parent=5 // pred_fallthru
        _
      %p190 = scmp.le.s32.totalorder 2, %s11
      // Predicated region
      $region33: #{tpu_custom_call.1} parent=5 // pred_check
        %p191 = pneg %p190
      $region34: #{tpu_custom_call.1} parent=5 // pred_check_branch
        %193 = sbr.rel (%p191) target = $region36
      $region35: #{tpu_custom_call.1} parent=5 // pred_region
        %s194 = ssub.s32 %s11, 2
        // Predicated region
        $region37: #{tpu_custom_call.1} parent=35 // pred_check
          %p195 = pneg %p87
        $region38: #{tpu_custom_call.1} parent=35 // pred_check_branch
          %197 = sbr.rel (%p195) target = $region40
        $region39: #{tpu_custom_call.1} parent=35 // pred_region
          %s198 = sand.u32 %s72, 1
          %s199 = scalar_lea.sflag [#allocation3], %s198
          %s200 = sand.u32 %s72, 1
          %s201 = smul.addr %s200, 8
          %s202 = scalar_lea.vmem [#allocation2], %s201
          %204 = dma.done %s199, 128
        $region40: #{tpu_custom_call.1} parent=35 // pred_fallthru
          _
      $region36: #{tpu_custom_call.1} parent=5 // pred_fallthru
        _
    $region6: #{tpu_custom_call.1} parent=1 // loop_footer
      %s15 = sadd.s32 1, %s11
    $region7: #{tpu_custom_call.1} parent=1 // loop_footer_branch
      %10 = sbr.rel target = $region3
    $region8: #{tpu_custom_call.1} parent=1 // loop_exit
      _
    %205 = vsyncpa [#allocation3], 1
    %s206 = scalar_lea.sflag [#allocation3], 1
    %207 = vsyncpa %s206, 1

</llo_original>
